<compile_context>
chip_gen: v5e
topology: v5e:2x2
jax: 0.10.0
libtpu: 0.0.40
codegen_flags: <defaults>
</compile_context>

<pallas_src>
import functools
import itertools

import jax
import jax.numpy as jnp
import numpy as np
from jax import lax
from jax.experimental import pallas as pl
from jax.experimental.pallas import tpu as pltpu

IN_CHANNELS = 8
OUT_CHANNELS = 16
KERNEL_SIZE = 3
STRIDE = 2
PADDING = 1


def _fused_kernel(a_ref, w_ref, bsum_ref, o_ref, *, bg, nb, rows_pad, n_par, cout):
    """Fused polyphase conv-transpose GEMM + 6x6x6 max-pool + channel sum.

    a_ref:    (1, bg*nb*rows_pad, 8*Cin)  bf16  polyphase patch rows (block-major, padded to 32)
    w_ref:    (8*Cin, 8*Cout)             bf16  columns = (parity_d, parity_h, parity_w, cout)
    bsum_ref: (1,)                        f32   sum of the conv bias over channels (SMEM)
    o_ref:    (1, bg, nb)                 f32   one value per pool block
    """
    a = a_ref[0]                                               # (rows, 64)
    w = w_ref[...]                                             # (64, 128)  lane-dense columns
    # ONE MXU pass per grid step, f32 accumulation; output fully lane-dense (128 cols).
    conv = jnp.dot(a, w, preferred_element_type=jnp.float32)   # (rows, 128)
    # Per pool-block max over the 32 row positions (27 real + 5 duplicated rows; max-safe).
    bmax = jnp.max(conv.reshape(bg * nb, rows_pad, n_par * cout), axis=1)   # (bg*nb, 128)
    # Max across the 8 parity lane-groups -> per-channel max over the whole 6x6x6 window.
    pm = bmax[:, 0:cout]
    for p in range(1, n_par):
        pm = jnp.maximum(pm, bmax[:, p * cout:(p + 1) * cout])
    # Channel sum + folded bias:  sum_c max(x_c + b_c) == sum_c max(x_c) + sum_c b_c.
    s = jnp.sum(pm, axis=1)                                    # (bg*nb,)
    o_ref[0] = s.reshape(bg, nb) + bsum_ref[0]                 # single lane-dense row store


@functools.partial(jax.jit, static_argnames=("stride", "padding"))
def conv_transpose3d_maxpool_sum(x, weight, bias, stride=STRIDE, padding=PADDING):
    """x: (B, Cin, D, H, W); weight: (Cin, Cout, K, K, K); bias: (Cout,)
    Returns (B, 1, n_out, n_out, n_out) matching the PyTorch module_fn."""
    B, Cin, D, H, W = x.shape
    _, Cout, K, _, _ = weight.shape
    assert stride == 2 and padding == 1 and K == 3, "polyphase path specialised to k=3, s=2, p=1"
    Do = (D - 1) * stride - 2 * padding + K
    Ho = (H - 1) * stride - 2 * padding + K
    Wo = (W - 1) * stride - 2 * padding + K
    assert Do == Ho == Wo, "this wrapper assumes cubic inputs"

    n_out = (Do // 2) // 3              # spatial size after both max-pools
    nb = n_out ** 3                     # 6x6x6 pool blocks per batch
    m_len = 3 * n_out                   # per-axis positions per parity surviving the pools
    n_par = 8                           # 2^3 output parity classes
    rows_real = 27                      # ceil(K/2)^3 positions per parity per pool block
    rows_pad = 32                       # padded to a sublane multiple (pad rows are duplicates)
    Kdim = n_par * Cin                  # 64  : contraction index = (off_d, off_h, off_w, ci)
    Ncol = n_par * Cout                 # 128 : output lanes      = (par_d, par_h, par_w, co)
    cdt = jnp.bfloat16                  # bf16 operands, f32 MXU accumulation

    # ---- compact polyphase patch rows: only the 2x2x2 input neighborhood per position ----
    # TODO(synk): for much larger spatial sizes, tile the pool blocks over a grid axis and
    # build these 2x2x2 neighborhood rows in-kernel from the raw input via manual DMA.
    xcl = jnp.transpose(x, (0, 2, 3, 4, 1)).astype(cdt)        # (B, D, H, W, Cin)
    slabs = [xcl[:, od:od + m_len, oh:oh + m_len, ow:ow + m_len, :]
             for od in (0, 1) for oh in (0, 1) for ow in (0, 1)]
    S = jnp.stack(slabs, axis=4)                               # (B, m, m, m, 8, Cin)
    S = S.reshape(B, m_len, m_len, m_len, Kdim)                # K = off_flat*Cin + ci
    S = S.reshape(B, n_out, 3, n_out, 3, n_out, 3, Kdim)
    S = jnp.transpose(S, (0, 1, 3, 5, 2, 4, 6, 7))             # block-major row ordering
    P = S.reshape(B, nb, rows_real, Kdim)
    P = jnp.concatenate([P, P[:, :, :rows_pad - rows_real, :]], axis=2)   # max-safe row padding
    # Batch groups: 2 "parallel" grid steps for v7x's two TensorCores; <=1 extra step on v5e/v6e.
    G = 2 if (B % 2 == 0 and B >= 2) else 1
    Bg = B // G
    A = P.reshape(G, Bg * nb * rows_pad, Kdim)                 # bf16, ~32 KiB per batch

    # ---- weight matrix: rows (off_d,off_h,off_w,ci), cols (par_d,par_h,par_w,co) ----
    # Direct transposed-conv formula: od = 2*md + pd reads x[md + off] with
    #   pd=0: tap k=1 (off=0);  pd=1: taps k=2 (off=0) and k=0 (off=1);  (off=1,pd=0): no tap.
    Wt = jnp.transpose(weight, (2, 3, 4, 0, 1)).astype(jnp.float32)       # (kd,kh,kw,ci,co)
    k_of = {(0, 0): 1, (0, 1): 2, (1, 1): 0}
    Wfull = jnp.zeros((Kdim, Ncol), jnp.float32)
    for od, oh, ow, pd, ph, pw in itertools.product((0, 1), repeat=6):
        if (od, pd) in k_of and (oh, ph) in k_of and (ow, pw) in k_of:
            kd, kh, kw = k_of[(od, pd)], k_of[(oh, ph)], k_of[(ow, pw)]
            r = ((od * 2 + oh) * 2 + ow) * Cin
            c = ((pd * 2 + ph) * 2 + pw) * Cout
            Wfull = Wfull.at[r:r + Cin, c:c + Cout].set(Wt[kd, kh, kw])
    Wfull = Wfull.astype(cdt)
    bsum = jnp.sum(bias).astype(jnp.float32).reshape(1)        # folded bias: one SMEM scalar

    kern = functools.partial(_fused_kernel, bg=Bg, nb=nb, rows_pad=rows_pad,
                             n_par=n_par, cout=Cout)
    rows_per_step = Bg * nb * rows_pad
    out = pl.pallas_call(
        kern,
        out_shape=jax.ShapeDtypeStruct((G, Bg, nb), jnp.float32),
        grid=(G,),
        in_specs=[
            pl.BlockSpec((1, rows_per_step, Kdim), lambda g: (g, 0, 0)),
            pl.BlockSpec((Kdim, Ncol), lambda g: (0, 0)),
            pl.BlockSpec(memory_space=pltpu.MemorySpace.SMEM),
        ],
        out_specs=pl.BlockSpec((1, Bg, nb), lambda g: (g, 0, 0)),
        compiler_params=pltpu.CompilerParams(
            dimension_semantics=("parallel",),          # shard the 2 steps across v7x's 2 TCs
            vmem_limit_bytes=8 * 1024 * 1024,           # right-sized; actual use ~<1 MiB
        ),
        cost_estimate=pl.CostEstimate(
            flops=2 * G * rows_per_step * Kdim * Ncol,
            transcendentals=0,
            bytes_accessed=A.size * 2 + Wfull.size * 2 + G * Bg * nb * 4),
    )(A, Wfull, bsum)
    # pool blocks are ordered (bd, bh, bw) -> NCDHW output with a single channel
    return out.reshape(B, 1, n_out, n_out, n_out)


def _reference(x, weight, bias, stride, padding):
    """Pure-JAX f32 reference of module_fn for validation."""
    K = weight.shape[2]
    r = jnp.transpose(jnp.flip(weight, axis=(2, 3, 4)), (1, 0, 2, 3, 4))  # (Cout, Cin, K, K, K)
    q = K - 1 - padding
    y = lax.conv_general_dilated(
        x, r, window_strides=(1, 1, 1), padding=[(q, q)] * 3,
        lhs_dilation=(stride, stride, stride),
        dimension_numbers=("NCDHW", "OIDHW", "NCDHW"))
    y = y + bias.reshape(1, -1, 1, 1, 1)
    y = lax.reduce_window(y, -jnp.inf, lax.max, (1, 1, 2, 2, 2), (1, 1, 2, 2, 2), "VALID")
    y = lax.reduce_window(y, -jnp.inf, lax.max, (1, 1, 3, 3, 3), (1, 1, 3, 3, 3), "VALID")
    return jnp.sum(y, axis=1, keepdims=True)


if __name__ == "__main__":
    B, D = 2, 8  # small shapes: batch=2, spatial=8^3
    key = jax.random.PRNGKey(0)
    kx, kw, kb = jax.random.split(key, 3)
    x = jax.random.normal(kx, (B, IN_CHANNELS, D, D, D), dtype=jnp.float32)
    # deterministic synthetic parameters (ConvTranspose3d weight layout: (Cin, Cout, K, K, K))
    weight = 0.05 * jax.random.normal(kw, (IN_CHANNELS, OUT_CHANNELS,
                                           KERNEL_SIZE, KERNEL_SIZE, KERNEL_SIZE), dtype=jnp.float32)
    bias = 0.05 * jax.random.normal(kb, (OUT_CHANNELS,), dtype=jnp.float32)

    out = conv_transpose3d_maxpool_sum(x, weight, bias, stride=STRIDE, padding=PADDING)
    out = jax.block_until_ready(out)

    ref = jax.block_until_ready(_reference(x, weight, bias, STRIDE, PADDING))
    assert out.shape == ref.shape, (out.shape, ref.shape)
    # bf16 operands (f32 accumulation) -> relaxed tolerance vs the f32 reference
    np.testing.assert_allclose(np.asarray(out), np.asarray(ref), rtol=1e-2, atol=1e-2)
    print("KERNEL_OK")
</pallas_src>

<mosaic_0001>
module attributes {stable_mosaic.version = 11 : i64} {
  func.func @_fused_kernel(%arg0: i32, %arg1: memref<1x256x64xbf16, #tpu.memory_space<vmem>>, %arg2: memref<64x128xbf16, #tpu.memory_space<vmem>>, %arg3: memref<1xf32, #tpu.memory_space<smem>>, %arg4: memref<1x1x8xf32, #tpu.memory_space<vmem>>) attributes {dimension_semantics = [#tpu.dimension_semantics<parallel>], iteration_bounds = array<i64: 2>, scalar_prefetch = 0 : i64, scratch_operands = 0 : i64, tpu.core_type = #tpu.core_type<tc>, window_params = [{transform_indices = @transform_0, window_bounds = array<i64: 1, 256, 64>}, {pipeline_mode = #tpu.pipeline_mode<synchronous>, transform_indices = @transform_1, window_bounds = array<i64: 64, 128>}, {transform_indices = @transform_2, window_bounds = array<i64: 1>}, {transform_indices = @transform_3, window_bounds = array<i64: 1, 1, 8>}]} {
    %c0 = arith.constant 0 : index
    %c0_0 = arith.constant 0 : index
    %c0_1 = arith.constant 0 : index
    %0 = vector.load %arg1[%c0, %c0_0, %c0_1] : memref<1x256x64xbf16, #tpu.memory_space<vmem>>, vector<1x256x64xbf16>
    %1 = vector.shape_cast %0 : vector<1x256x64xbf16> to vector<256x64xbf16>
    %c0_2 = arith.constant 0 : index
    %c0_3 = arith.constant 0 : index
    %2 = vector.load %arg2[%c0_2, %c0_3] : memref<64x128xbf16, #tpu.memory_space<vmem>>, vector<64x128xbf16>
    %cst = arith.constant dense<0.000000e+00> : vector<256x128xf32>
    %3 = tpu.matmul %1, %2, %cst {dimension_numbers = #tpu.dot_dimension_numbers<[1], [0], [0], [1], [0, 0, 1, 1], [], []>} : vector<256x64xbf16>, vector<64x128xbf16>, vector<256x128xf32> -> vector<256x128xf32>
    %4 = vector.shape_cast %3 : vector<256x128xf32> to vector<8x32x128xf32>
    %cst_4 = arith.constant dense<0xFF800000> : vector<8x128xf32>
    %5 = vector.multi_reduction <maximumf>, %4, %cst_4 [1] : vector<8x32x128xf32> to vector<8x128xf32>
    %6 = vector.extract_strided_slice %5 {offsets = [0, 0], sizes = [8, 16], strides = [1, 1]} : vector<8x128xf32> to vector<8x16xf32>
    %7 = vector.extract_strided_slice %5 {offsets = [0, 16], sizes = [8, 16], strides = [1, 1]} : vector<8x128xf32> to vector<8x16xf32>
    %8 = arith.maximumf %6, %7 : vector<8x16xf32>
    %9 = vector.extract_strided_slice %5 {offsets = [0, 32], sizes = [8, 16], strides = [1, 1]} : vector<8x128xf32> to vector<8x16xf32>
    %10 = arith.maximumf %8, %9 : vector<8x16xf32>
    %11 = vector.extract_strided_slice %5 {offsets = [0, 48], sizes = [8, 16], strides = [1, 1]} : vector<8x128xf32> to vector<8x16xf32>
    %12 = arith.maximumf %10, %11 : vector<8x16xf32>
    %13 = vector.extract_strided_slice %5 {offsets = [0, 64], sizes = [8, 16], strides = [1, 1]} : vector<8x128xf32> to vector<8x16xf32>
    %14 = arith.maximumf %12, %13 : vector<8x16xf32>
    %15 = vector.extract_strided_slice %5 {offsets = [0, 80], sizes = [8, 16], strides = [1, 1]} : vector<8x128xf32> to vector<8x16xf32>
    %16 = arith.maximumf %14, %15 : vector<8x16xf32>
    %17 = vector.extract_strided_slice %5 {offsets = [0, 96], sizes = [8, 16], strides = [1, 1]} : vector<8x128xf32> to vector<8x16xf32>
    %18 = arith.maximumf %16, %17 : vector<8x16xf32>
    %19 = vector.extract_strided_slice %5 {offsets = [0, 112], sizes = [8, 16], strides = [1, 1]} : vector<8x128xf32> to vector<8x16xf32>
    %20 = arith.maximumf %18, %19 : vector<8x16xf32>
    %cst_5 = arith.constant dense<0.000000e+00> : vector<8xf32>
    %21 = vector.multi_reduction <add>, %20, %cst_5 [1] : vector<8x16xf32> to vector<8xf32>
    %22 = vector.shape_cast %21 : vector<8xf32> to vector<1x8xf32>
    %c0_6 = arith.constant 0 : index
    %23 = memref.load %arg3[%c0_6] : memref<1xf32, #tpu.memory_space<smem>>
    %24 = vector.broadcast %23 : f32 to vector<1x8xf32>
    %25 = arith.addf %22, %24 : vector<1x8xf32>
    %c0_7 = arith.constant 0 : index
    %c0_8 = arith.constant 0 : index
    %c0_9 = arith.constant 0 : index
    %26 = vector.load %arg4[%c0_7, %c0_8, %c0_9] : memref<1x1x8xf32, #tpu.memory_space<vmem>>, vector<1x1x8xf32>
    %27 = vector.shape_cast %26 : vector<1x1x8xf32> to vector<1x8xf32>
    %28 = vector.shape_cast %25 : vector<1x8xf32> to vector<1x1x8xf32>
    tpu.vector_store %arg4[%c0_7, %c0_8, %c0_9], %28 {strides = array<i32>} : memref<1x1x8xf32, #tpu.memory_space<vmem>>, vector<1x1x8xf32>,
    return
  }
  func.func @transform_0(%arg0: i32) -> (i32, i32, i32) {
    %c0_i32 = arith.constant 0 : i32
    %c0_i32_0 = arith.constant 0 : i32
    %c0_i32_1 = arith.constant 0 : i32
    return %arg0, %c0_i32, %c0_i32_0 : i32, i32, i32
  }
  func.func @transform_1(%arg0: i32) -> (i32, i32) {
    %c0_i32 = arith.constant 0 : i32
    %c0_i32_0 = arith.constant 0 : i32
    %c0_i32_1 = arith.constant 0 : i32
    return %c0_i32, %c0_i32_0 : i32, i32
  }
  func.func @transform_2(%arg0: i32) -> i32 {
    %c0_i32 = arith.constant 0 : i32
    %c0_i32_0 = arith.constant 0 : i32
    return %c0_i32 : i32
  }
  func.func @transform_3(%arg0: i32) -> (i32, i32, i32) {
    %c0_i32 = arith.constant 0 : i32
    %c0_i32_0 = arith.constant 0 : i32
    %c0_i32_1 = arith.constant 0 : i32
    return %arg0, %c0_i32, %c0_i32_0 : i32, i32, i32
  }
}

</mosaic_0001>

<llo_original>
// kernel: conv_transpose3d_maxpool_sum.1
$region0: #{conv_transpose3d_maxpool_sum.1}
  #allocation0 [shape = 'u32[]', space=smem, size = 0x4, offset = 0x4, fixed_abs, tag = 'smem constant byte address 0x4 - core index']
  #allocation1 [shape = 'u32[72,128]{1,0:T(1,128)}', space=vmem, size = 0x9000, scoped, tag = 'internal scratch']
  #allocation2 [shape = 'f32[1]{0:T(128)S(6)}', space=smem, size = 0x200, scoped, tag = 'scoped memory for conv_transpose3d_maxpool_sum.1']
  %s0 = inlined_call_operand.vmem [shape: bf16[2,256,64], index: 0, kind: input, shape index: {}]
  %s1 = inlined_call_operand.vmem [shape: bf16[64,128], index: 1, kind: input, shape index: {}]
  %s2 = inlined_call_operand.<no memory space> [shape: f32[1], index: 2, kind: input, shape index: {}]
  %s3 = inlined_call_operand.vmem [shape: f32[2,1,8], index: 3, kind: output, shape index: {}]
  %s4 = sld [smem:[#allocation0]]
  $region45: #{conv_transpose3d_maxpool_sum.1} parent=0
    _
  %s6 = ssub.s32 1, %s4
  %s7 = scalar_select 0, %s6, %s4
  %8 = sst [smem:[#allocation2]] %s2
  loop: start=0, step=1, limit=4
  $region2: #{conv_transpose3d_maxpool_sum.1} parent=0 // loop_pre_header
    _
  $region3: #{conv_transpose3d_maxpool_sum.1} parent=0 // loop_header
    %s10 = sphi 0, %s14
    %p11 = scmp.ge.s32.totalorder %s10, 4
    %s20 = sphi 0, %s22
    %s23 = sphi 0, %s20
    %s24 = sphi 0, %s23
    %s40 = sphi 0, %s24
    %s44 = sphi 0, %s44
    %s46 = sphi 0, %s44
    %s47 = sphi 0, %s46
    %s61 = sphi 0, %s47
    %s65 = sphi 0, %s65
    %s67 = sphi 0, %s65
    %s68 = sphi 0, %s67
    %s82 = sphi 0, %s68
    %s88 = sphi 0, %s90
    %s91 = sphi 0, %s88
    %s92 = sphi 0, %s91
    %s108 = sphi 0, %s92
  $region4: #{conv_transpose3d_maxpool_sum.1} parent=0 // loop_header_branch
    %13 = sbr.rel (%p11) target = $region8
  $region5: #{conv_transpose3d_maxpool_sum.1} parent=0 // loop_body
    %s15 = ssub.s32 %s10, 1
    %s16 = ssub.s32 %s10, 2
    %s17 = sadd.s32 %s10, 1
    %s18 = ssub.s32 %s10, %s17
    %p19 = scmp.eq.s32.totalorder %s18, 0
    %s21 = sadd.s32 %s20, 1
    %s22 = scalar_select %p19, %s20, %s21
    %p25 = pneg %p19
    %p26 = scmp.eq.s32.totalorder %s10, 1
    %p27 = por %p25, %p26
    %p28 = scmp.ne.s32.totalorder %s20, %s23
    %p29 = scmp.eq.s32.totalorder %s10, 0
    %p30 = por %p28, %p29
    %p31 = scmp.ne.s32.totalorder %s20, %s23
    %p32 = scmp.eq.s32.totalorder %s15, 1
    %p33 = por %p31, %p32
    %p34 = scmp.ne.s32.totalorder %s23, %s24
    %p35 = scmp.eq.s32.totalorder %s15, 0
    %p36 = por %p34, %p35
    %p37 = scmp.ne.s32.totalorder %s23, %s24
    %p38 = scmp.eq.s32.totalorder %s16, 1
    %p39 = por %p37, %p38
    %p41 = scmp.ne.s32.totalorder %s24, %s40
    %p42 = scmp.eq.s32.totalorder %s16, 0
    %p43 = por %p41, %p42
    %s45 = sadd.s32 %s44, 1
    %p48 = scmp.eq.s32.totalorder %s10, 1
    %p49 = scmp.ne.s32.totalorder %s44, %s46
    %p50 = scmp.eq.s32.totalorder %s10, 0
    %p51 = por %p49, %p50
    %p52 = scmp.ne.s32.totalorder %s44, %s46
    %p53 = scmp.eq.s32.totalorder %s15, 1
    %p54 = por %p52, %p53
    %p55 = scmp.ne.s32.totalorder %s46, %s47
    %p56 = scmp.eq.s32.totalorder %s15, 0
    %p57 = por %p55, %p56
    %p58 = scmp.ne.s32.totalorder %s46, %s47
    %p59 = scmp.eq.s32.totalorder %s16, 1
    %p60 = por %p58, %p59
    %p62 = scmp.ne.s32.totalorder %s47, %s61
    %p63 = scmp.eq.s32.totalorder %s16, 0
    %p64 = por %p62, %p63
    %s66 = sadd.s32 %s65, 1
    %p69 = scmp.eq.s32.totalorder %s10, 1
    %p70 = scmp.ne.s32.totalorder %s65, %s67
    %p71 = scmp.eq.s32.totalorder %s10, 0
    %p72 = por %p70, %p71
    %p73 = scmp.ne.s32.totalorder %s65, %s67
    %p74 = scmp.eq.s32.totalorder %s15, 1
    %p75 = por %p73, %p74
    %p76 = scmp.ne.s32.totalorder %s67, %s68
    %p77 = scmp.eq.s32.totalorder %s15, 0
    %p78 = por %p76, %p77
    %p79 = scmp.ne.s32.totalorder %s67, %s68
    %p80 = scmp.eq.s32.totalorder %s16, 1
    %p81 = por %p79, %p80
    %p83 = scmp.ne.s32.totalorder %s68, %s82
    %p84 = scmp.eq.s32.totalorder %s16, 0
    %p85 = por %p83, %p84
    %s86 = ssub.s32 %s10, %s17
    %p87 = scmp.eq.s32.totalorder %s86, 0
    %s89 = sadd.s32 %s88, 1
    %s90 = scalar_select %p87, %s88, %s89
    %p93 = pneg %p87
    %p94 = scmp.eq.s32.totalorder %s10, 1
    %p95 = por %p93, %p94
    %p96 = scmp.ne.s32.totalorder %s88, %s91
    %p97 = scmp.eq.s32.totalorder %s10, 0
    %p98 = por %p96, %p97
    %p99 = scmp.ne.s32.totalorder %s88, %s91
    %p100 = scmp.eq.s32.totalorder %s15, 1
    %p101 = por %p99, %p100
    %p102 = scmp.ne.s32.totalorder %s91, %s92
    %p103 = scmp.eq.s32.totalorder %s15, 0
    %p104 = por %p102, %p103
    %p105 = scmp.ne.s32.totalorder %s91, %s92
    %p106 = scmp.eq.s32.totalorder %s16, 1
    %p107 = por %p105, %p106
    %p109 = scmp.ne.s32.totalorder %s92, %s108
    %p110 = scmp.eq.s32.totalorder %s16, 0
    %p111 = por %p109, %p110
    %p112 = scmp.le.s32.totalorder 1, %s10
    %p113 = scmp.lt.s32.totalorder %s10, 3
    %p114 = pnand %p112, %p113
    %p115 = pneg %p114
    // Predicated region
    $region9: #{conv_transpose3d_maxpool_sum.1} parent=5 // pred_check
      _
    $region10: #{conv_transpose3d_maxpool_sum.1} parent=5 // pred_check_branch
      %117 = sbr.rel (%p114) target = $region12
    $region11: #{conv_transpose3d_maxpool_sum.1} parent=5 // pred_region
      %s118 = ssub.s32 %s10, 1
      // Predicated region
      $region13: #{conv_transpose3d_maxpool_sum.1} parent=11 // pred_check
        %p119 = pneg %p57
      $region14: #{conv_transpose3d_maxpool_sum.1} parent=11 // pred_check_branch
        %121 = sbr.rel (%p119) target = $region16
      $region15: #{conv_transpose3d_maxpool_sum.1} parent=11 // pred_region
        _
      $region16: #{conv_transpose3d_maxpool_sum.1} parent=11 // pred_fallthru
        _
      // Predicated region
      $region17: #{conv_transpose3d_maxpool_sum.1} parent=11 // pred_check
        %p122 = pneg %p78
      $region18: #{conv_transpose3d_maxpool_sum.1} parent=11 // pred_check_branch
        %124 = sbr.rel (%p122) target = $region20
      $region19: #{conv_transpose3d_maxpool_sum.1} parent=11 // pred_region
        _
      $region20: #{conv_transpose3d_maxpool_sum.1} parent=11 // pred_fallthru
        _
    $region12: #{conv_transpose3d_maxpool_sum.1} parent=5 // pred_fallthru
      _
    %p125 = scmp.lt.s32.totalorder %s10, 2
    // Predicated region
    $region21: #{conv_transpose3d_maxpool_sum.1} parent=5 // pred_check
      %p126 = pneg %p125
    $region22: #{conv_transpose3d_maxpool_sum.1} parent=5 // pred_check_branch
      %128 = sbr.rel (%p126) target = $region24
    $region23: #{conv_transpose3d_maxpool_sum.1} parent=5 // pred_region
      // Predicated region
      $region25: #{conv_transpose3d_maxpool_sum.1} parent=23 // pred_check
        %p129 = pneg %p30
      $region26: #{conv_transpose3d_maxpool_sum.1} parent=23 // pred_check_branch
        %131 = sbr.rel (%p129) target = $region28
      $region27: #{conv_transpose3d_maxpool_sum.1} parent=23 // pred_region
        %p132 = scmp.lt.s32.totalorder %s10, 1
        %s133 = scalar_select %p132, %s10, 1
        %s134 = smul.addr %s133, 32
        %s135 = smul.addr %s134, 4
        %s136 = scalar_lea.vmem %s0, %s135
      $region28: #{conv_transpose3d_maxpool_sum.1} parent=23 // pred_fallthru
        _
    $region24: #{conv_transpose3d_maxpool_sum.1} parent=5 // pred_fallthru
      _
    %p137 = scmp.le.s32.totalorder 1, %s10
    %p138 = scmp.lt.s32.totalorder %s10, 3
    %p139 = pnand %p137, %p138
    %p140 = pneg %p139
    // Predicated region
    $region29: #{conv_transpose3d_maxpool_sum.1} parent=5 // pred_check
      _
    $region30: #{conv_transpose3d_maxpool_sum.1} parent=5 // pred_check_branch
      %142 = sbr.rel (%p139) target = $region32
    $region31: #{conv_transpose3d_maxpool_sum.1} parent=5 // pred_region
      %s143 = ssub.s32 %s10, 1
      %p144 = scmp.lt.s32.totalorder %s15, 1
      %s145 = scalar_select %p144, %s15, 1
      %s146 = smul.addr %s145, 32
      %s147 = smul.addr %s146, 4
      %s148 = scalar_lea.vmem %s0, %s147
      %p149 = pneg %p36
      %p150 = pneg %p33
      %p151 = pneg %p57
      %p152 = pneg %p54
      %p153 = pneg %p78
      %p154 = pneg %p75
      %p155 = pneg %p104
      %p156 = pneg %p101
      %p157 = scmp.lt.s32.totalorder %s15, 1
      %s158 = scalar_select %p157, %s15, 1
      %s159 = scalar_lea.vmem %s3, %s158
      %p160 = scmp.lt.s32.totalorder %s15, 1
      %s161 = scalar_select %p160, %s15, 1
      %s162 = smul.addr %s161, 32
      %s163 = smul.addr %s162, 4
      %s164 = scalar_lea.vmem %s0, %s163
      %p165 = scmp.lt.s32.totalorder %s15, 1
      %s166 = scalar_select %p165, %s15, 1
      %s167 = scalar_lea.vmem %s3, %s166
      %v169 = vld [vmem:[%s164] sm:$0xf]
      %v170 = vld [vmem:[%s164 + $0x4] sm:$0xf]
      %v171 = vld [vmem:[%s164 + $0x8] sm:$0xf]
      %v172 = vld [vmem:[%s164 + $0xc] sm:$0xf]
      %v173 = vld [vmem:[%s164 + $0x10] sm:$0xf]
      %v174 = vld [vmem:[%s164 + $0x14] sm:$0xf]
      %v175 = vld [vmem:[%s164 + $0x18] sm:$0xf]
      %v176 = vld [vmem:[%s164 + $0x1c] sm:$0xf]
      %v177 = vld [vmem:[%s164 + $0x20] sm:$0xf]
      %v178 = vld [vmem:[%s164 + $0x24] sm:$0xf]
      %v179 = vld [vmem:[%s164 + $0x28] sm:$0xf]
      %v180 = vld [vmem:[%s164 + $0x2c] sm:$0xf]
      %v181 = vld [vmem:[%s164 + $0x30] sm:$0xf]
      %v182 = vld [vmem:[%s164 + $0x34] sm:$0xf]
      %v183 = vld [vmem:[%s164 + $0x38] sm:$0xf]
      %v184 = vld [vmem:[%s164 + $0x3c] sm:$0xf]
      %v185 = vld [vmem:[%s164 + $0x40] sm:$0xf]
      %v186 = vld [vmem:[%s164 + $0x44] sm:$0xf]
      %v187 = vld [vmem:[%s164 + $0x48] sm:$0xf]
      %v188 = vld [vmem:[%s164 + $0x4c] sm:$0xf]
      %v189 = vld [vmem:[%s164 + $0x50] sm:$0xf]
      %v190 = vld [vmem:[%s164 + $0x54] sm:$0xf]
      %v191 = vld [vmem:[%s164 + $0x58] sm:$0xf]
      %v192 = vld [vmem:[%s164 + $0x5c] sm:$0xf]
      %v193 = vld [vmem:[%s164 + $0x60] sm:$0xf]
      %v194 = vld [vmem:[%s164 + $0x64] sm:$0xf]
      %v195 = vld [vmem:[%s164 + $0x68] sm:$0xf]
      %v196 = vld [vmem:[%s164 + $0x6c] sm:$0xf]
      %v197 = vld [vmem:[%s164 + $0x70] sm:$0xf]
      %v198 = vld [vmem:[%s164 + $0x74] sm:$0xf]
      %v199 = vld [vmem:[%s164 + $0x78] sm:$0xf]
      %v200 = vld [vmem:[%s164 + $0x7c] sm:$0xf]
      %v201 = vld [vmem:[%s1] sm:$0xf]
      %v202 = vld [vmem:[%s1 + $0x4] sm:$0xf]
      %v203 = vld [vmem:[%s1 + $0x8] sm:$0xf]
      %v204 = vld [vmem:[%s1 + $0xc] sm:$0xf]
      %v205 = vld [vmem:[%s1 + $0x10] sm:$0xf]
      %v206 = vld [vmem:[%s1 + $0x14] sm:$0xf]
      %v207 = vld [vmem:[%s1 + $0x18] sm:$0xf]
      %v208 = vld [vmem:[%s1 + $0x1c] sm:$0xf]
      %v241 = vunpack.c.l.b16 %v169
      %v242 = vunpack.c.l.b16 %v170
      %v243 = vunpack.c.l.b16 %v171
      %v244 = vunpack.c.l.b16 %v172
      %v245 = vunpack.c.l.b16 %v173
      %v246 = vunpack.c.l.b16 %v174
      %v247 = vunpack.c.l.b16 %v175
      %v248 = vunpack.c.l.b16 %v176
      %v249 = vunpack.c.l.b16 %v177
      %v250 = vunpack.c.l.b16 %v178
      %v251 = vunpack.c.l.b16 %v179
      %v252 = vunpack.c.l.b16 %v180
      %v253 = vunpack.c.l.b16 %v181
      %v254 = vunpack.c.l.b16 %v182
      %v255 = vunpack.c.l.b16 %v183
      %v256 = vunpack.c.l.b16 %v184
      %v257 = vunpack.c.l.b16 %v185
      %v258 = vunpack.c.l.b16 %v186
      %v259 = vunpack.c.l.b16 %v187
      %v260 = vunpack.c.l.b16 %v188
      %v261 = vunpack.c.l.b16 %v189
      %v262 = vunpack.c.l.b16 %v190
      %v263 = vunpack.c.l.b16 %v191
      %v264 = vunpack.c.l.b16 %v192
      %v265 = vunpack.c.l.b16 %v193
      %v266 = vunpack.c.l.b16 %v194
      %v267 = vunpack.c.l.b16 %v195
      %v268 = vunpack.c.l.b16 %v196
      %v269 = vunpack.c.l.b16 %v197
      %v270 = vunpack.c.l.b16 %v198
      %v271 = vunpack.c.l.b16 %v199
      %v272 = vunpack.c.l.b16 %v200
      %v273 = vpack.c.b16 %v242, %v241
      %v274 = vpack.c.b16 %v244, %v243
      %v275 = vpack.c.b16 %v246, %v245
      %v276 = vpack.c.b16 %v248, %v247
      %v277 = vpack.c.b16 %v250, %v249
      %v278 = vpack.c.b16 %v252, %v251
      %v279 = vpack.c.b16 %v254, %v253
      %v280 = vpack.c.b16 %v256, %v255
      %v281 = vpack.c.b16 %v258, %v257
      %v282 = vpack.c.b16 %v260, %v259
      %v283 = vpack.c.b16 %v262, %v261
      %v284 = vpack.c.b16 %v264, %v263
      %v285 = vpack.c.b16 %v266, %v265
      %v286 = vpack.c.b16 %v268, %v267
      %v287 = vpack.c.b16 %v270, %v269
      %v288 = vpack.c.b16 %v272, %v271
      %v297 = vunpack.c.l.b16 %v201
      %v298 = vunpack.c.l.b16 %v202
      %v299 = vunpack.c.l.b16 %v203
      %v300 = vunpack.c.l.b16 %v204
      %v301 = vunpack.c.l.b16 %v205
      %v302 = vunpack.c.l.b16 %v206
      %v303 = vunpack.c.l.b16 %v207
      %v304 = vunpack.c.l.b16 %v208
      %v305 = vpack.c.b16 %v298, %v297
      %v306 = vpack.c.b16 %v300, %v299
      %v307 = vpack.c.b16 %v302, %v301
      %v308 = vpack.c.b16 %v304, %v303
      %vm313 = vcmask 523264
      %v315 = vsel %vm313, %v273, 0
      %v318 = vsel %vm313, %v274, 0
      %v321 = vsel %vm313, %v275, 0
      %v324 = vsel %vm313, %v276, 0
      %v327 = vsel %vm313, %v277, 0
      %v330 = vsel %vm313, %v278, 0
      %v333 = vsel %vm313, %v279, 0
      %v336 = vsel %vm313, %v280, 0
      %v339 = vsel %vm313, %v281, 0
      %v342 = vsel %vm313, %v282, 0
      %v345 = vsel %vm313, %v283, 0
      %v348 = vsel %vm313, %v284, 0
      %v351 = vsel %vm313, %v285, 0
      %v354 = vsel %vm313, %v286, 0
      %v357 = vsel %vm313, %v287, 0
      %v360 = vsel %vm313, %v288, 0
      %362 = vmatpush.bf16.msra.mxu0 0
      %363 = vmatpush.bf16.msra.mxu0 0
      %364 = vmatpush.bf16.msra.mxu0 0
      %365 = vmatpush.bf16.msra.mxu0 0
      %366 = vmatpush.bf16.msra.mxu0 %v308
      %367 = vmatpush.bf16.msra.mxu0 %v307
      %368 = vmatpush.bf16.msra.mxu0 %v306
      %369 = vmatpush.bf16.msra.mxu0 %v305
      %370 = vmatmul.bf16.gmra.mxu0 %v315
      %v371 = vpop.f32.mrf.mxu0
      %v372 = vadd.f32 0.0, %v371
      %v373 = vpop.f32.mrf.mxu0
      %v374 = vadd.f32 0.0, %v373
      %375 = vmatmul.bf16.gmra.mxu0 %v318
      %v376 = vpop.f32.mrf.mxu0
      %v377 = vadd.f32 0.0, %v376
      %v378 = vpop.f32.mrf.mxu0
      %v379 = vadd.f32 0.0, %v378
      %380 = vmatmul.bf16.gmra.mxu0 %v321
      %v381 = vpop.f32.mrf.mxu0
      %v382 = vadd.f32 0.0, %v381
      %v383 = vpop.f32.mrf.mxu0
      %v384 = vadd.f32 0.0, %v383
      %385 = vmatmul.bf16.gmra.mxu0 %v324
      %v386 = vpop.f32.mrf.mxu0
      %v387 = vadd.f32 0.0, %v386
      %v388 = vpop.f32.mrf.mxu0
      %v389 = vadd.f32 0.0, %v388
      %390 = vmatmul.bf16.gmra.mxu0 %v327
      %v391 = vpop.f32.mrf.mxu0
      %v392 = vadd.f32 0.0, %v391
      %v393 = vpop.f32.mrf.mxu0
      %v394 = vadd.f32 0.0, %v393
      %395 = vmatmul.bf16.gmra.mxu0 %v330
      %v396 = vpop.f32.mrf.mxu0
      %v397 = vadd.f32 0.0, %v396
      %v398 = vpop.f32.mrf.mxu0
      %v399 = vadd.f32 0.0, %v398
      %400 = vmatmul.bf16.gmra.mxu0 %v333
      %v401 = vpop.f32.mrf.mxu0
      %v402 = vadd.f32 0.0, %v401
      %v403 = vpop.f32.mrf.mxu0
      %v404 = vadd.f32 0.0, %v403
      %405 = vmatmul.bf16.gmra.mxu0 %v336
      %v406 = vpop.f32.mrf.mxu0
      %v407 = vadd.f32 0.0, %v406
      %v408 = vpop.f32.mrf.mxu0
      %v409 = vadd.f32 0.0, %v408
      %410 = vmatmul.bf16.gmra.mxu0 %v339
      %v411 = vpop.f32.mrf.mxu0
      %v412 = vadd.f32 0.0, %v411
      %v413 = vpop.f32.mrf.mxu0
      %v414 = vadd.f32 0.0, %v413
      %415 = vmatmul.bf16.gmra.mxu0 %v342
      %v416 = vpop.f32.mrf.mxu0
      %v417 = vadd.f32 0.0, %v416
      %v418 = vpop.f32.mrf.mxu0
      %v419 = vadd.f32 0.0, %v418
      %420 = vmatmul.bf16.gmra.mxu0 %v345
      %v421 = vpop.f32.mrf.mxu0
      %v422 = vadd.f32 0.0, %v421
      %v423 = vpop.f32.mrf.mxu0
      %v424 = vadd.f32 0.0, %v423
      %425 = vmatmul.bf16.gmra.mxu0 %v348
      %v426 = vpop.f32.mrf.mxu0
      %v427 = vadd.f32 0.0, %v426
      %v428 = vpop.f32.mrf.mxu0
      %v429 = vadd.f32 0.0, %v428
      %430 = vmatmul.bf16.gmra.mxu0 %v351
      %v431 = vpop.f32.mrf.mxu0
      %v432 = vadd.f32 0.0, %v431
      %v433 = vpop.f32.mrf.mxu0
      %v434 = vadd.f32 0.0, %v433
      %435 = vmatmul.bf16.gmra.mxu0 %v354
      %v436 = vpop.f32.mrf.mxu0
      %v437 = vadd.f32 0.0, %v436
      %v438 = vpop.f32.mrf.mxu0
      %v439 = vadd.f32 0.0, %v438
      %440 = vmatmul.bf16.gmra.mxu0 %v357
      %v441 = vpop.f32.mrf.mxu0
      %v442 = vadd.f32 0.0, %v441
      %v443 = vpop.f32.mrf.mxu0
      %v444 = vadd.f32 0.0, %v443
      %445 = vmatmul.bf16.gmra.mxu0 %v360
      %v446 = vpop.f32.mrf.mxu0
      %v447 = vadd.f32 0.0, %v446
      %v448 = vpop.f32.mrf.mxu0
      %v449 = vadd.f32 0.0, %v448
      %450 = vdwg.mxu0
      %v451 = vmax.f32 %v372, %v374
      %v452 = vmax.f32 %v451, %v377
      %v453 = vmax.f32 %v452, %v379
      %v454 = vrot.slane %v453, 4
      %v455 = vmax.f32 %v453, %v454
      %v456 = vrot.slane %v455, 2
      %v457 = vmax.f32 %v455, %v456
      %v458 = vrot.slane %v457, 1
      %v459 = vmax.f32 %v457, %v458
      %v460 = vmax.f32 %v382, %v384
      %v461 = vmax.f32 %v460, %v387
      %v462 = vmax.f32 %v461, %v389
      %v463 = vrot.slane %v462, 4
      %v464 = vmax.f32 %v462, %v463
      %v465 = vrot.slane %v464, 2
      %v466 = vmax.f32 %v464, %v465
      %v467 = vrot.slane %v466, 1
      %v468 = vmax.f32 %v466, %v467
      %v469 = vmax.f32 %v392, %v394
      %v470 = vmax.f32 %v469, %v397
      %v471 = vmax.f32 %v470, %v399
      %v472 = vrot.slane %v471, 4
      %v473 = vmax.f32 %v471, %v472
      %v474 = vrot.slane %v473, 2
      %v475 = vmax.f32 %v473, %v474
      %v476 = vrot.slane %v475, 1
      %v477 = vmax.f32 %v475, %v476
      %v478 = vmax.f32 %v402, %v404
      %v479 = vmax.f32 %v478, %v407
      %v480 = vmax.f32 %v479, %v409
      %v481 = vrot.slane %v480, 4
      %v482 = vmax.f32 %v480, %v481
      %v483 = vrot.slane %v482, 2
      %v484 = vmax.f32 %v482, %v483
      %v485 = vrot.slane %v484, 1
      %v486 = vmax.f32 %v484, %v485
      %v487 = vmax.f32 %v412, %v414
      %v488 = vmax.f32 %v487, %v417
      %v489 = vmax.f32 %v488, %v419
      %v490 = vrot.slane %v489, 4
      %v491 = vmax.f32 %v489, %v490
      %v492 = vrot.slane %v491, 2
      %v493 = vmax.f32 %v491, %v492
      %v494 = vrot.slane %v493, 1
      %v495 = vmax.f32 %v493, %v494
      %v496 = vmax.f32 %v422, %v424
      %v497 = vmax.f32 %v496, %v427
      %v498 = vmax.f32 %v497, %v429
      %v499 = vrot.slane %v498, 4
      %v500 = vmax.f32 %v498, %v499
      %v501 = vrot.slane %v500, 2
      %v502 = vmax.f32 %v500, %v501
      %v503 = vrot.slane %v502, 1
      %v504 = vmax.f32 %v502, %v503
      %v505 = vmax.f32 %v432, %v434
      %v506 = vmax.f32 %v505, %v437
      %v507 = vmax.f32 %v506, %v439
      %v508 = vrot.slane %v507, 4
      %v509 = vmax.f32 %v507, %v508
      %v510 = vrot.slane %v509, 2
      %v511 = vmax.f32 %v509, %v510
      %v512 = vrot.slane %v511, 1
      %v513 = vmax.f32 %v511, %v512
      %v514 = vmax.f32 %v442, %v444
      %v515 = vmax.f32 %v514, %v447
      %v516 = vmax.f32 %v515, %v449
      %v517 = vrot.slane %v516, 4
      %v518 = vmax.f32 %v516, %v517
      %v519 = vrot.slane %v518, 2
      %v520 = vmax.f32 %v518, %v519
      %v521 = vrot.slane %v520, 1
      %v522 = vmax.f32 %v520, %v521
      %531 = vrot.lane.b32.xlu0 %v459, 112
      %v532 = vpop.permute.xlu0 %531
      %533 = vrot.lane.b32.xlu0 %v468, 112
      %v534 = vpop.permute.xlu0 %533
      %535 = vrot.lane.b32.xlu0 %v477, 112
      %v536 = vpop.permute.xlu0 %535
      %537 = vrot.lane.b32.xlu0 %v486, 112
      %v538 = vpop.permute.xlu0 %537
      %539 = vrot.lane.b32.xlu0 %v495, 112
      %v540 = vpop.permute.xlu0 %539
      %541 = vrot.lane.b32.xlu0 %v504, 112
      %v542 = vpop.permute.xlu0 %541
      %543 = vrot.lane.b32.xlu0 %v513, 112
      %v544 = vpop.permute.xlu0 %543
      %545 = vrot.lane.b32.xlu0 %v522, 112
      %v546 = vpop.permute.xlu0 %545
      %v555 = vmax.f32 %v459, %v532
      %v556 = vmax.f32 %v468, %v534
      %v557 = vmax.f32 %v477, %v536
      %v558 = vmax.f32 %v486, %v538
      %v559 = vmax.f32 %v495, %v540
      %v560 = vmax.f32 %v504, %v542
      %v561 = vmax.f32 %v513, %v544
      %v562 = vmax.f32 %v522, %v546
      %563 = vrot.lane.b32.xlu0 %v459, 96
      %v564 = vpop.permute.xlu0 %563
      %565 = vrot.lane.b32.xlu0 %v468, 96
      %v566 = vpop.permute.xlu0 %565
      %567 = vrot.lane.b32.xlu0 %v477, 96
      %v568 = vpop.permute.xlu0 %567
      %569 = vrot.lane.b32.xlu0 %v486, 96
      %v570 = vpop.permute.xlu0 %569
      %571 = vrot.lane.b32.xlu0 %v495, 96
      %v572 = vpop.permute.xlu0 %571
      %573 = vrot.lane.b32.xlu0 %v504, 96
      %v574 = vpop.permute.xlu0 %573
      %575 = vrot.lane.b32.xlu0 %v513, 96
      %v576 = vpop.permute.xlu0 %575
      %577 = vrot.lane.b32.xlu0 %v522, 96
      %v578 = vpop.permute.xlu0 %577
      %v587 = vmax.f32 %v555, %v564
      %v588 = vmax.f32 %v556, %v566
      %v589 = vmax.f32 %v557, %v568
      %v590 = vmax.f32 %v558, %v570
      %v591 = vmax.f32 %v559, %v572
      %v592 = vmax.f32 %v560, %v574
      %v593 = vmax.f32 %v561, %v576
      %v594 = vmax.f32 %v562, %v578
      %595 = vrot.lane.b32.xlu0 %v459, 80
      %v596 = vpop.permute.xlu0 %595
      %597 = vrot.lane.b32.xlu0 %v468, 80
      %v598 = vpop.permute.xlu0 %597
      %599 = vrot.lane.b32.xlu0 %v477, 80
      %v600 = vpop.permute.xlu0 %599
      %601 = vrot.lane.b32.xlu0 %v486, 80
      %v602 = vpop.permute.xlu0 %601
      %603 = vrot.lane.b32.xlu0 %v495, 80
      %v604 = vpop.permute.xlu0 %603
      %605 = vrot.lane.b32.xlu0 %v504, 80
      %v606 = vpop.permute.xlu0 %605
      %607 = vrot.lane.b32.xlu0 %v513, 80
      %v608 = vpop.permute.xlu0 %607
      %609 = vrot.lane.b32.xlu0 %v522, 80
      %v610 = vpop.permute.xlu0 %609
      %v619 = vmax.f32 %v587, %v596
      %v620 = vmax.f32 %v588, %v598
      %v621 = vmax.f32 %v589, %v600
      %v622 = vmax.f32 %v590, %v602
      %v623 = vmax.f32 %v591, %v604
      %v624 = vmax.f32 %v592, %v606
      %v625 = vmax.f32 %v593, %v608
      %v626 = vmax.f32 %v594, %v610
      %627 = vrot.lane.b32.xlu0 %v459, 64
      %v628 = vpop.permute.xlu0 %627
      %629 = vrot.lane.b32.xlu0 %v468, 64
      %v630 = vpop.permute.xlu0 %629
      %631 = vrot.lane.b32.xlu0 %v477, 64
      %v632 = vpop.permute.xlu0 %631
      %633 = vrot.lane.b32.xlu0 %v486, 64
      %v634 = vpop.permute.xlu0 %633
      %635 = vrot.lane.b32.xlu0 %v495, 64
      %v636 = vpop.permute.xlu0 %635
      %637 = vrot.lane.b32.xlu0 %v504, 64
      %v638 = vpop.permute.xlu0 %637
      %639 = vrot.lane.b32.xlu0 %v513, 64
      %v640 = vpop.permute.xlu0 %639
      %641 = vrot.lane.b32.xlu0 %v522, 64
      %v642 = vpop.permute.xlu0 %641
      %v651 = vmax.f32 %v619, %v628
      %v652 = vmax.f32 %v620, %v630
      %v653 = vmax.f32 %v621, %v632
      %v654 = vmax.f32 %v622, %v634
      %v655 = vmax.f32 %v623, %v636
      %v656 = vmax.f32 %v624, %v638
      %v657 = vmax.f32 %v625, %v640
      %v658 = vmax.f32 %v626, %v642
      %659 = vrot.lane.b32.xlu0 %v459, 48
      %v660 = vpop.permute.xlu0 %659
      %661 = vrot.lane.b32.xlu0 %v468, 48
      %v662 = vpop.permute.xlu0 %661
      %663 = vrot.lane.b32.xlu0 %v477, 48
      %v664 = vpop.permute.xlu0 %663
      %665 = vrot.lane.b32.xlu0 %v486, 48
      %v666 = vpop.permute.xlu0 %665
      %667 = vrot.lane.b32.xlu0 %v495, 48
      %v668 = vpop.permute.xlu0 %667
      %669 = vrot.lane.b32.xlu0 %v504, 48
      %v670 = vpop.permute.xlu0 %669
      %671 = vrot.lane.b32.xlu0 %v513, 48
      %v672 = vpop.permute.xlu0 %671
      %673 = vrot.lane.b32.xlu0 %v522, 48
      %v674 = vpop.permute.xlu0 %673
      %v683 = vmax.f32 %v651, %v660
      %v684 = vmax.f32 %v652, %v662
      %v685 = vmax.f32 %v653, %v664
      %v686 = vmax.f32 %v654, %v666
      %v687 = vmax.f32 %v655, %v668
      %v688 = vmax.f32 %v656, %v670
      %v689 = vmax.f32 %v657, %v672
      %v690 = vmax.f32 %v658, %v674
      %691 = vrot.lane.b32.xlu0 %v459, 32
      %v692 = vpop.permute.xlu0 %691
      %693 = vrot.lane.b32.xlu0 %v468, 32
      %v694 = vpop.permute.xlu0 %693
      %695 = vrot.lane.b32.xlu0 %v477, 32
      %v696 = vpop.permute.xlu0 %695
      %697 = vrot.lane.b32.xlu0 %v486, 32
      %v698 = vpop.permute.xlu0 %697
      %699 = vrot.lane.b32.xlu0 %v495, 32
      %v700 = vpop.permute.xlu0 %699
      %701 = vrot.lane.b32.xlu0 %v504, 32
      %v702 = vpop.permute.xlu0 %701
      %703 = vrot.lane.b32.xlu0 %v513, 32
      %v704 = vpop.permute.xlu0 %703
      %705 = vrot.lane.b32.xlu0 %v522, 32
      %v706 = vpop.permute.xlu0 %705
      %v715 = vmax.f32 %v683, %v692
      %v716 = vmax.f32 %v684, %v694
      %v717 = vmax.f32 %v685, %v696
      %v718 = vmax.f32 %v686, %v698
      %v719 = vmax.f32 %v687, %v700
      %v720 = vmax.f32 %v688, %v702
      %v721 = vmax.f32 %v689, %v704
      %v722 = vmax.f32 %v690, %v706
      %723 = vrot.lane.b32.xlu0 %v459, 16
      %v724 = vpop.permute.xlu0 %723
      %725 = vrot.lane.b32.xlu0 %v468, 16
      %v726 = vpop.permute.xlu0 %725
      %727 = vrot.lane.b32.xlu0 %v477, 16
      %v728 = vpop.permute.xlu0 %727
      %729 = vrot.lane.b32.xlu0 %v486, 16
      %v730 = vpop.permute.xlu0 %729
      %731 = vrot.lane.b32.xlu0 %v495, 16
      %v732 = vpop.permute.xlu0 %731
      %733 = vrot.lane.b32.xlu0 %v504, 16
      %v734 = vpop.permute.xlu0 %733
      %735 = vrot.lane.b32.xlu0 %v513, 16
      %v736 = vpop.permute.xlu0 %735
      %737 = vrot.lane.b32.xlu0 %v522, 16
      %v738 = vpop.permute.xlu0 %737
      %v747 = vmax.f32 %v715, %v724
      %v748 = vmax.f32 %v716, %v726
      %v749 = vmax.f32 %v717, %v728
      %v750 = vmax.f32 %v718, %v730
      %v751 = vmax.f32 %v719, %v732
      %v752 = vmax.f32 %v720, %v734
      %v753 = vmax.f32 %v721, %v736
      %v754 = vmax.f32 %v722, %v738
      %v763 = vrot.slane %v748, 7
      %vm764 = vcmask 1041409
      %v765 = vsel %vm764, %v763, %v747
      %v766 = vrot.slane %v749, 6
      %vm767 = vcmask 1042434
      %v768 = vsel %vm767, %v766, %v765
      %v769 = vrot.slane %v750, 5
      %vm770 = vcmask 1043459
      %v771 = vsel %vm770, %v769, %v768
      %v772 = vrot.slane %v751, 4
      %vm773 = vcmask 1044484
      %v774 = vsel %vm773, %v772, %v771
      %v775 = vrot.slane %v752, 3
      %vm776 = vcmask 1045509
      %v777 = vsel %vm776, %v775, %v774
      %v778 = vrot.slane %v753, 2
      %vm779 = vcmask 1046534
      %v780 = vsel %vm779, %v778, %v777
      %v781 = vrot.slane %v754, 1
      %vm782 = vcmask 1047559
      %v783 = vsel %vm782, %v781, %v780
      %vm785 = vcmask 130048
      %v786 = vsel %vm785, %v783, 0.0
      %787 = vadd.xlane.f32.xlu0 %v786
      %v788 = vpop.xlane.xlu0 %787
      %s789 = sld [smem:[#allocation2]]
      %v790 = vstv %s789
      %v791 = vadd.f32 %v788, %v790
      %v793 = vlaneseq
      %v794 = vand.u32 %v793, 127
      %v795 = vperm.slane %v791, %v794
      %vm797 = vcmask 57344
      %798 = vst.msk [vmem:[%s167] sm:$0x1] %vm797, %v795
      %p799 = scmp.lt.s32.totalorder %s15, 1
      %s800 = scalar_select %p799, %s15, 1
      %s801 = scalar_lea.vmem %s3, %s800
      // Predicated region
      $region33: #{conv_transpose3d_maxpool_sum.1} parent=31 // pred_check
        %p802 = pneg %p101
      $region34: #{conv_transpose3d_maxpool_sum.1} parent=31 // pred_check_branch
        %804 = sbr.rel (%p802) target = $region36
      $region35: #{conv_transpose3d_maxpool_sum.1} parent=31 // pred_region
        _
      $region36: #{conv_transpose3d_maxpool_sum.1} parent=31 // pred_fallthru
        _
    $region32: #{conv_transpose3d_maxpool_sum.1} parent=5 // pred_fallthru
      _
    %p805 = scmp.le.s32.totalorder 2, %s10
    // Predicated region
    $region37: #{conv_transpose3d_maxpool_sum.1} parent=5 // pred_check
      %p806 = pneg %p805
    $region38: #{conv_transpose3d_maxpool_sum.1} parent=5 // pred_check_branch
      %808 = sbr.rel (%p806) target = $region40
    $region39: #{conv_transpose3d_maxpool_sum.1} parent=5 // pred_region
      %s809 = ssub.s32 %s10, 2
      // Predicated region
      $region41: #{conv_transpose3d_maxpool_sum.1} parent=39 // pred_check
        %p810 = pneg %p107
      $region42: #{conv_transpose3d_maxpool_sum.1} parent=39 // pred_check_branch
        %812 = sbr.rel (%p810) target = $region44
      $region43: #{conv_transpose3d_maxpool_sum.1} parent=39 // pred_region
        %p813 = scmp.lt.s32.totalorder %s16, 1
        %s814 = scalar_select %p813, %s16, 1
        %s815 = scalar_lea.vmem %s3, %s814
      $region44: #{conv_transpose3d_maxpool_sum.1} parent=39 // pred_fallthru
        _
    $region40: #{conv_transpose3d_maxpool_sum.1} parent=5 // pred_fallthru
      _
  $region6: #{conv_transpose3d_maxpool_sum.1} parent=0 // loop_footer
    %s14 = sadd.s32 1, %s10
  $region7: #{conv_transpose3d_maxpool_sum.1} parent=0 // loop_footer_branch
    %9 = sbr.rel target = $region3
  $region8: #{conv_transpose3d_maxpool_sum.1} parent=0 // loop_exit
    _

</llo_original>
